<compile_context>
chip_gen: v6e
topology: v6e:2x2x1
jax: 0.10.0
libtpu: 0.0.40
codegen_flags: <defaults>
</compile_context>

<pallas_src>
import jax
import jax.numpy as jnp
from jax.experimental import pallas as pl
from jax.experimental.pallas import tpu as pltpu


def _h_swish_kernel(x_ref, o_ref):
    x = x_ref[...]
    # Compute in f32 unless the input is already f32 (safe on v5e, matches the
    # PyTorch reference closely for bf16/f16 inputs).
    xf = x if x.dtype == jnp.float32 else x.astype(jnp.float32)
    # h_sigmoid(x) = relu6(x + 3) / 6 ; h_swish(x) = x * h_sigmoid(x)
    y = xf * (jnp.clip(xf + 3.0, 0.0, 6.0) * (1.0 / 6.0))
    o_ref[...] = y.astype(o_ref.dtype)


def _h_swish_jnp(x):
    """Pure-JAX fallback / reference matching the PyTorch h_swish forward."""
    return x * (jnp.clip(x + 3.0, 0.0, 6.0) / 6.0)


def h_swish(x, *, target_block_bytes=4 << 20, small_bytes_threshold=256 << 10,
            force_pallas=False):
    """Elementwise h_swish over an arbitrary-shaped array.

    Uses a lane-dense tiled Pallas kernel when the element count factors into
    a (rows, lane) slab with lane a multiple of 128; otherwise (or for tiny
    inputs) falls back to plain jnp, which XLA fuses and which is faster at
    those sizes anyway.
    """
    orig_shape = x.shape
    dtype = x.dtype
    n = x.size
    itemsize = jnp.dtype(dtype).itemsize

    # Fast path: tiny inputs are dominated by launch overhead.
    if not force_pallas and n * itemsize < small_bytes_threshold:
        return _h_swish_jnp(x)

    # Pick the largest lane width that divides n exactly (no padding passes).
    lane = None
    for cand in (1024, 512, 256, 128):
        if n % cand == 0:
            lane = cand
            break
    if lane is None:
        # TODO(synk): could pad-to-128 inside a dedicated tail kernel; the jnp
        # fallback is simpler and this case is rare for NCHW activations.
        return _h_swish_jnp(x)

    total_rows = n // lane
    slab = x.reshape(total_rows, lane)  # free: contiguous metadata reshape

    # Size the block in bytes (~target_block_bytes per buffer per step) so
    # bf16 inputs move the same bytes per step as f32.
    if total_rows <= 8:
        block_rows = total_rows  # single block equal to the full dim
    else:
        block_rows = max(8, (target_block_bytes // (lane * itemsize)) // 8 * 8)
        # Cap so grid extent >= 2 when possible (v7x: shard across both TCs).
        half_rows = max(8, (total_rows // 2) // 8 * 8)
        block_rows = min(block_rows, half_rows)
        # Never exceed the largest multiple of 8 that fits in total_rows.
        block_rows = min(block_rows, (total_rows // 8) * 8)

    grid = (pl.cdiv(total_rows, block_rows),)

    out = pl.pallas_call(
        _h_swish_kernel,
        out_shape=jax.ShapeDtypeStruct((total_rows, lane), dtype),
        grid=grid,
        in_specs=[pl.BlockSpec((block_rows, lane), lambda i: (i, 0))],
        out_specs=pl.BlockSpec((block_rows, lane), lambda i: (i, 0)),
        compiler_params=pltpu.CompilerParams(
            dimension_semantics=("parallel",),
        ),
        cost_estimate=pl.CostEstimate(
            flops=5 * n,              # add, max, min, 2 muls per element
            transcendentals=0,
            bytes_accessed=2 * n * itemsize,
        ),
    )(slab)

    return out.reshape(orig_shape)


if __name__ == "__main__":
    key = jax.random.PRNGKey(0)

    # Test 1: the module's nominal small NCHW activation (forces the Pallas
    # path so the kernel itself is exercised even below the fast-path cutoff).
    B, C, H, W = 2, 4, 16, 16
    k1, k2 = jax.random.split(key)
    x1 = jax.random.normal(k1, (B, C, H, W), dtype=jnp.float32) * 3.0
    out1 = jax.block_until_ready(h_swish(x1, force_pallas=True))
    ref1 = _h_swish_jnp(x1)
    assert out1.shape == x1.shape and out1.dtype == x1.dtype
    assert jnp.allclose(out1, ref1, atol=1e-6, rtol=1e-6), "mismatch (test 1)"

    # Test 2: slightly larger shape exercising the multi-block (grid >= 2)
    # path with a ragged-safe tiling.
    x2 = jax.random.normal(k2, (2, 8, 32, 32), dtype=jnp.float32) * 3.0
    out2 = jax.block_until_ready(h_swish(x2, force_pallas=True))
    ref2 = _h_swish_jnp(x2)
    assert out2.shape == x2.shape and out2.dtype == x2.dtype
    assert jnp.allclose(out2, ref2, atol=1e-6, rtol=1e-6), "mismatch (test 2)"

    print("KERNEL_OK")
</pallas_src>

<mosaic_0001>
module attributes {stable_mosaic.version = 11 : i64} {
  func.func @_h_swish_kernel(%arg0: i32, %arg1: memref<2x1024xf32, #tpu.memory_space<vmem>>, %arg2: memref<2x1024xf32, #tpu.memory_space<vmem>>) attributes {dimension_semantics = [#tpu.dimension_semantics<parallel>], iteration_bounds = array<i64: 1>, scalar_prefetch = 0 : i64, scratch_operands = 0 : i64, tpu.core_type = #tpu.core_type<tc>, window_params = [{transform_indices = @transform_0, window_bounds = array<i64: 2, 1024>}, {transform_indices = @transform_1, window_bounds = array<i64: 2, 1024>}]} {
    %c0 = arith.constant 0 : index
    %c0_0 = arith.constant 0 : index
    %0 = vector.load %arg1[%c0, %c0_0] : memref<2x1024xf32, #tpu.memory_space<vmem>>, vector<2x1024xf32>
    %cst = arith.constant 3.000000e+00 : f32
    %1 = vector.broadcast %cst : f32 to vector<2x1024xf32>
    %2 = arith.addf %0, %1 : vector<2x1024xf32>
    %cst_1 = arith.constant 0.000000e+00 : f32
    %cst_2 = arith.constant 6.000000e+00 : f32
    %3 = vector.broadcast %cst_1 : f32 to vector<2x1024xf32>
    %4 = arith.maximumf %3, %2 : vector<2x1024xf32>
    %5 = vector.broadcast %cst_2 : f32 to vector<2x1024xf32>
    %6 = arith.minimumf %5, %4 : vector<2x1024xf32>
    %cst_3 = arith.constant 0.166666672 : f32
    %7 = vector.broadcast %cst_3 : f32 to vector<2x1024xf32>
    %8 = arith.mulf %6, %7 : vector<2x1024xf32>
    %9 = arith.mulf %0, %8 : vector<2x1024xf32>
    %c0_4 = arith.constant 0 : index
    %c0_5 = arith.constant 0 : index
    %10 = vector.load %arg2[%c0_4, %c0_5] : memref<2x1024xf32, #tpu.memory_space<vmem>>, vector<2x1024xf32>
    tpu.vector_store %arg2[%c0_4, %c0_5], %9 {strides = array<i32>} : memref<2x1024xf32, #tpu.memory_space<vmem>>, vector<2x1024xf32>,
    return
  }
  func.func @transform_0(%arg0: i32) -> (i32, i32) {
    %c0_i32 = arith.constant 0 : i32
    %c0_i32_0 = arith.constant 0 : i32
    return %arg0, %c0_i32 : i32, i32
  }
  func.func @transform_1(%arg0: i32) -> (i32, i32) {
    %c0_i32 = arith.constant 0 : i32
    %c0_i32_0 = arith.constant 0 : i32
    return %arg0, %c0_i32 : i32, i32
  }
}

</mosaic_0001>

<llo_original>
// kernel: tpu_custom_call.1
$region0: #{tpu_custom_call.1}
  #allocation0 [shape = 'u32[]', space=smem, size = 0x4, offset = 0x4, fixed_abs, tag = 'smem constant byte address 0x4 - core index']
  #allocation1 [shape = 'u32[144,128]{1,0:T(1,128)}', space=vmem, size = 0x12000, scoped, tag = 'internal scratch']
  %s0 = inlined_call_operand.hbm [shape: f32[2,1024], index: 0, kind: input, shape index: {}]
  %s1 = inlined_call_operand.hbm [shape: f32[2,1024], index: 1, kind: output, shape index: {}]
  %s2 = sld [smem:[#allocation0]]
  $region18: #{tpu_custom_call.1} parent=0
    _
  %s4 = ssub.s32 1, %s2
  %s5 = scalar_select 0, %s4, %s2
  $region1: #{tpu_custom_call.1} parent=0
    #allocation2 [shape = 'u8[8192]{0}', space=vmem, size = 0x2000, scoped, tag = 'input window, operand 0, single buffered']
    #allocation3 [shape = 's32[1]{0}', space=sflag, size = 0x4, scoped, tag = 'scoped memory for tpu_custom_call.1']
    #allocation4 [shape = 's32[1]{0}', space=sflag, size = 0x4, scoped, tag = 'scoped memory for tpu_custom_call.1']
    #allocation5 [shape = 'u8[8192]{0}', space=vmem, size = 0x2000, scoped, tag = 'output window, operand 0, single buffered']
    %6 = vsyncpa [#allocation3], 0
    %7 = vsyncpa [#allocation4], 0
    // Predicated region
    $region2: #{tpu_custom_call.1} parent=1 // pred_check
      _
    $region3: #{tpu_custom_call.1} parent=1 // pred_check_branch
      %9 = sbr.rel (0) target = $region5
    $region4: #{tpu_custom_call.1} parent=1 // pred_region
      %s11 = ssub.s32 256, 256
      %12 = vsyncadd [#allocation3], %s11
      %s14 = sshll.u32 [#allocation2], 4
      %s15 = int_to_ptr.vmem [resolvable:$true] %s14
      %17 = dma.hbm_to_vmem [thread:$0]  %s0, 256, %s15, [#allocation3]
    $region5: #{tpu_custom_call.1} parent=1 // pred_fallthru
      _
    // Predicated region
    $region6: #{tpu_custom_call.1} parent=1 // pred_check
      _
    $region7: #{tpu_custom_call.1} parent=1 // pred_check_branch
      %19 = sbr.rel (0) target = $region9
    $region8: #{tpu_custom_call.1} parent=1 // pred_region
      %20 = dma.done [#allocation3], 256
    $region9: #{tpu_custom_call.1} parent=1 // pred_fallthru
      _
    %v21 = vld [vmem:[#allocation2] sm:$0xff]
    %v22 = vld [vmem:[#allocation2 + $0x8] sm:$0xff]
    %v23 = vadd.f32 %v21, 3.0
    %v24 = vadd.f32 %v22, 3.0
    %v25 = vmax.f32 %v23, 0.0
    %v26 = vmax.f32 %v24, 0.0
    %v27 = vmin.f32 %v25, 6.0
    %v28 = vmin.f32 %v26, 6.0
    %v29 = vmul.f32 %v27, 0.16666667
    %v30 = vmul.f32 %v28, 0.16666667
    %v31 = vmul.f32 %v21, %v29
    %v32 = vmul.f32 %v22, %v30
    %33 = vst [vmem:[#allocation5] sm:$0xff] %v31
    %34 = vst [vmem:[#allocation5 + $0x8] sm:$0xff] %v32
    // Predicated region
    $region10: #{tpu_custom_call.1} parent=1 // pred_check
      _
    $region11: #{tpu_custom_call.1} parent=1 // pred_check_branch
      %36 = sbr.rel (0) target = $region13
    $region12: #{tpu_custom_call.1} parent=1 // pred_region
      %s38 = ssub.s32 256, 256
      %39 = vsyncadd [#allocation4], %s38
      %s41 = sshll.u32 [#allocation5], 4
      %s42 = int_to_ptr.vmem [resolvable:$true] %s41
      %44 = dma.vmem_to_hbm [thread:$0]  %s42, 256, %s1, [#allocation4]
    $region13: #{tpu_custom_call.1} parent=1 // pred_fallthru
      _
    // Predicated region
    $region14: #{tpu_custom_call.1} parent=1 // pred_check
      _
    $region15: #{tpu_custom_call.1} parent=1 // pred_check_branch
      %46 = sbr.rel (0) target = $region17
    $region16: #{tpu_custom_call.1} parent=1 // pred_region
      %47 = dma.done [#allocation4], 256
    $region17: #{tpu_custom_call.1} parent=1 // pred_fallthru
      _
    %48 = vsyncpa [#allocation3], 1
    %49 = vsyncpa [#allocation4], 1

</llo_original>
